<compile_context>
chip_gen: v7x
topology: tpu7x:2x2x1
jax: 0.10.0
libtpu: 0.0.40
codegen_flags: <defaults>
</compile_context>

<pallas_src>
import functools

import jax
import jax.numpy as jnp
from jax.experimental import pallas as pl
from jax.experimental.pallas import tpu as pltpu


def _round_up(x: int, m: int) -> int:
    return (x + m - 1) // m * m


def _rqvae_loss_kernel(q_ref, v_ref, out_ref, acc_ref, *, scale):
    """One (bt, tk) tile: accumulate sum((q - v)^2) over the lane axis."""
    k = pl.program_id(1)

    @pl.when(k == 0)
    def _():
        acc_ref[...] = jnp.zeros_like(acc_ref)

    # Upcast per tile (keeps HBM traffic in the input dtype), square on the
    # VPU, lane reduction on the XLU.
    d = q_ref[...].astype(jnp.float32) - v_ref[...].astype(jnp.float32)
    acc_ref[...] += jnp.sum(d * d, axis=-1, keepdims=True)  # [bt, 1]

    @pl.when(k == pl.num_programs(1) - 1)
    def _():
        # Forward value of emb_loss + w * query_loss == (1 + w) * sum((q-v)^2).
        out_ref[...] = (scale * acc_ref[...]).astype(out_ref.dtype)


def rqvae_loss(query, value, commitment_weight: float = 1.0):
    """Pallas implementation of RqVaeLoss.forward (forward value only)."""
    assert query.shape == value.shape
    assert query.ndim >= 2

    batch_shape = query.shape[:-2]
    n, d = query.shape[-2:]
    nd = n * d
    b = 1
    for s in batch_shape:
        b *= s

    out_dtype = jnp.result_type(query.dtype, value.dtype)

    # Flatten leading dims and the two reduced axes -> [B, N*D] (lane-dense).
    q2 = query.reshape(b, nd)
    v2 = value.reshape(b, nd)

    # Tile sizes: lane axis a large multiple of 128, sublane (batch) axis a
    # multiple of 8 capped at 128.  Per-input block <= 128*2048*4B = 1 MiB, so
    # 2 inputs x 2 pipeline buffers stay far under even v7x's scoped VMEM.
    tk = min(2048, _round_up(nd, 128))
    bt = min(128, _round_up(b, 8))

    b_pad = _round_up(b, bt)
    nd_pad = _round_up(nd, tk)
    if (b_pad, nd_pad) != (b, nd):
        # Zero padding is exact: padded elements contribute (0-0)^2 == 0.
        q2 = jnp.pad(q2, ((0, b_pad - b), (0, nd_pad - nd)))
        v2 = jnp.pad(v2, ((0, b_pad - b), (0, nd_pad - nd)))

    grid = (b_pad // bt, nd_pad // tk)

    kernel = functools.partial(
        _rqvae_loss_kernel, scale=1.0 + float(commitment_weight)
    )

    out = pl.pallas_call(
        kernel,
        out_shape=jax.ShapeDtypeStruct((b_pad, 1), out_dtype),
        grid_spec=pltpu.PrefetchScalarGridSpec(
            num_scalar_prefetch=0,
            grid=grid,
            in_specs=[
                pl.BlockSpec((bt, tk), lambda i, k: (i, k)),
                pl.BlockSpec((bt, tk), lambda i, k: (i, k)),
            ],
            # Constant block index across k -> output resident across the
            # reduction axis; only written on the last k step.
            out_specs=pl.BlockSpec((bt, 1), lambda i, k: (i, 0)),
            scratch_shapes=[pltpu.VMEM((bt, 1), jnp.float32)],
        ),
        compiler_params=pltpu.CompilerParams(
            dimension_semantics=("parallel", "arbitrary"),
            vmem_limit_bytes=64 << 20,
        ),
    )(q2, v2)

    out = out[:b, 0]
    return out.reshape(batch_shape)


def _reference(query, value, commitment_weight: float = 1.0):
    q = query.astype(jnp.float32)
    v = value.astype(jnp.float32)
    emb = jnp.sum((q - v) ** 2, axis=(-1, -2))
    qry = jnp.sum((q - v) ** 2, axis=(-1, -2))
    return emb + commitment_weight * qry


if __name__ == "__main__":
    key = jax.random.PRNGKey(0)
    kq, kv, kq2, kv2 = jax.random.split(key, 4)

    # Case 1: B=2, N=8, D=32 (ND=256, lane-aligned; batch padded 2 -> 8).
    B, N, D = 2, 8, 32
    query = jax.random.normal(kq, (B, N, D), dtype=jnp.float32)
    value = jax.random.normal(kv, (B, N, D), dtype=jnp.float32)
    w = 0.25
    out = jax.block_until_ready(rqvae_loss(query, value, w))
    ref = _reference(query, value, w)
    assert out.shape == (B,), out.shape
    assert jnp.allclose(out, ref, rtol=1e-5, atol=1e-5), (out, ref)

    # Case 2: non-aligned reduced size (N=5, D=20 -> ND=100, padded to 128).
    B2, N2, D2 = 3, 5, 20
    q2 = jax.random.normal(kq2, (B2, N2, D2), dtype=jnp.float32)
    v2 = jax.random.normal(kv2, (B2, N2, D2), dtype=jnp.float32)
    out2 = jax.block_until_ready(rqvae_loss(q2, v2, 1.0))
    ref2 = _reference(q2, v2, 1.0)
    assert out2.shape == (B2,), out2.shape
    assert jnp.allclose(out2, ref2, rtol=1e-5, atol=1e-5), (out2, ref2)

    print("KERNEL_OK")
</pallas_src>

<mosaic_0001>
module attributes {stable_mosaic.version = 11 : i64} {
  func.func @_rqvae_loss_kernel(%arg0: i32, %arg1: i32, %arg2: memref<8x256xf32, #tpu.memory_space<vmem>>, %arg3: memref<8x256xf32, #tpu.memory_space<vmem>>, %arg4: memref<8x1xf32, #tpu.memory_space<vmem>>, %arg5: memref<8x1xf32, #tpu.memory_space<vmem>>) attributes {dimension_semantics = [#tpu.dimension_semantics<parallel>, #tpu.dimension_semantics<arbitrary>], iteration_bounds = array<i64: 1, 1>, scalar_prefetch = 0 : i64, scratch_operands = 1 : i64, tpu.core_type = #tpu.core_type<tc>, window_params = [{transform_indices = @transform_0, window_bounds = array<i64: 8, 256>}, {transform_indices = @transform_1, window_bounds = array<i64: 8, 256>}, {transform_indices = @transform_2, window_bounds = array<i64: 8, 1>}]} {
    %c0_i32 = arith.constant 0 : i32
    %0 = arith.cmpi eq, %arg1, %c0_i32 : i32
    %1 = arith.extui %0 : i1 to i32
    %c0_i32_0 = arith.constant 0 : i32
    %2 = arith.cmpi ne, %1, %c0_i32_0 : i32
    scf.if %2 {
      %cst_10 = arith.constant 0.000000e+00 : f32
      %15 = vector.broadcast %cst_10 : f32 to vector<8x1xf32>
      %c0_11 = arith.constant 0 : index
      %c0_12 = arith.constant 0 : index
      %16 = vector.load %arg5[%c0_11, %c0_12] : memref<8x1xf32, #tpu.memory_space<vmem>>, vector<8x1xf32>
      tpu.vector_store %arg5[%c0_11, %c0_12], %15 {strides = array<i32>} : memref<8x1xf32, #tpu.memory_space<vmem>>, vector<8x1xf32>,
    } else {
    }
    %c0 = arith.constant 0 : index
    %c0_1 = arith.constant 0 : index
    %3 = vector.load %arg2[%c0, %c0_1] : memref<8x256xf32, #tpu.memory_space<vmem>>, vector<8x256xf32>
    %c0_2 = arith.constant 0 : index
    %c0_3 = arith.constant 0 : index
    %4 = vector.load %arg3[%c0_2, %c0_3] : memref<8x256xf32, #tpu.memory_space<vmem>>, vector<8x256xf32>
    %5 = arith.subf %3, %4 : vector<8x256xf32>
    %c0_4 = arith.constant 0 : index
    %c0_5 = arith.constant 0 : index
    %6 = vector.load %arg5[%c0_4, %c0_5] : memref<8x1xf32, #tpu.memory_space<vmem>>, vector<8x1xf32>
    %7 = arith.mulf %5, %5 : vector<8x256xf32>
    %cst = arith.constant dense<0.000000e+00> : vector<8xf32>
    %8 = vector.multi_reduction <add>, %7, %cst [1] : vector<8x256xf32> to vector<8xf32>
    %9 = vector.shape_cast %8 : vector<8xf32> to vector<8x1xf32>
    %10 = arith.addf %6, %9 : vector<8x1xf32>
    %c0_6 = arith.constant 0 : index
    %c0_7 = arith.constant 0 : index
    %11 = vector.load %arg5[%c0_6, %c0_7] : memref<8x1xf32, #tpu.memory_space<vmem>>, vector<8x1xf32>
    tpu.vector_store %arg5[%c0_6, %c0_7], %10 {strides = array<i32>} : memref<8x1xf32, #tpu.memory_space<vmem>>, vector<8x1xf32>,
    %c0_i32_8 = arith.constant 0 : i32
    %12 = arith.cmpi eq, %arg1, %c0_i32_8 : i32
    %13 = arith.extui %12 : i1 to i32
    %c0_i32_9 = arith.constant 0 : i32
    %14 = arith.cmpi ne, %13, %c0_i32_9 : i32
    scf.if %14 {
      %c0_10 = arith.constant 0 : index
      %c0_11 = arith.constant 0 : index
      %15 = vector.load %arg5[%c0_10, %c0_11] : memref<8x1xf32, #tpu.memory_space<vmem>>, vector<8x1xf32>
      %cst_12 = arith.constant 1.250000e+00 : f32
      %16 = vector.broadcast %cst_12 : f32 to vector<8x1xf32>
      %17 = arith.mulf %16, %15 : vector<8x1xf32>
      %c0_13 = arith.constant 0 : index
      %c0_14 = arith.constant 0 : index
      %18 = vector.load %arg4[%c0_13, %c0_14] : memref<8x1xf32, #tpu.memory_space<vmem>>, vector<8x1xf32>
      tpu.vector_store %arg4[%c0_13, %c0_14], %17 {strides = array<i32>} : memref<8x1xf32, #tpu.memory_space<vmem>>, vector<8x1xf32>,
    } else {
    }
    return
  }
  func.func @transform_0(%arg0: i32, %arg1: i32) -> (i32, i32) {
    %c0_i32 = arith.constant 0 : i32
    return %arg0, %arg1 : i32, i32
  }
  func.func @transform_1(%arg0: i32, %arg1: i32) -> (i32, i32) {
    %c0_i32 = arith.constant 0 : i32
    return %arg0, %arg1 : i32, i32
  }
  func.func @transform_2(%arg0: i32, %arg1: i32) -> (i32, i32) {
    %c0_i32 = arith.constant 0 : i32
    %c0_i32_0 = arith.constant 0 : i32
    return %arg0, %c0_i32 : i32, i32
  }
}

</mosaic_0001>

<llo_original>
// kernel: tpu_custom_call.1
$region0: #{tpu_custom_call.1}
  #allocation0 [shape = 'u32[]', space=smem, size = 0x4, offset = 0x4, fixed_abs, tag = 'smem constant byte address 0x4 - core index']
  #allocation1 [shape = 'u32[144,128]{1,0:T(1,128)}', space=vmem, size = 0x12000, scoped, tag = 'internal scratch']
  #allocation2 [shape = 'f32[8,1]{1,0:T(8,128)}', space=vmem, size = 0x1000, scoped, tag = 'scratch operand']
  %s0 = inlined_call_operand.hbm [shape: f32[8,256], index: 0, kind: input, shape index: {}]
  %s1 = inlined_call_operand.hbm [shape: f32[8,256], index: 1, kind: input, shape index: {}]
  %s2 = inlined_call_operand.hbm [shape: f32[8,1], index: 2, kind: output, shape index: {}]
  %s3 = sld [smem:[#allocation0]]
  $region34: #{tpu_custom_call.1} parent=0
    _
  %s5 = ssub.s32 1, %s3
  %s6 = scalar_select 0, %s5, %s3
  $region1: #{tpu_custom_call.1} parent=0
    #allocation3 [shape = 'u8[8192]{0}', space=vmem, size = 0x2000, scoped, tag = 'input window, operand 0, single buffered']
    #allocation4 [shape = 's32[1]{0}', space=sflag, size = 0x4, scoped, tag = 'scoped memory for tpu_custom_call.1']
    #allocation5 [shape = 's32[1]{0}', space=sflag, size = 0x4, scoped, tag = 'scoped memory for tpu_custom_call.1']
    #allocation6 [shape = 'u8[8192]{0}', space=vmem, size = 0x2000, scoped, tag = 'input window, operand 1, single buffered']
    #allocation7 [shape = 's32[1]{0}', space=sflag, size = 0x4, scoped, tag = 'scoped memory for tpu_custom_call.1']
    #allocation8 [shape = 'u8[4096]{0}', space=vmem, size = 0x1000, scoped, tag = 'output window, operand 0, single buffered']
    %7 = vsyncpa [#allocation4], 0
    %8 = vsyncpa [#allocation7], 0
    %9 = vsyncpa [#allocation5], 0
    // Predicated region
    $region2: #{tpu_custom_call.1} parent=1 // pred_check
      _
    $region3: #{tpu_custom_call.1} parent=1 // pred_check_branch
      %11 = sbr.rel (0) target = $region5
    $region4: #{tpu_custom_call.1} parent=1 // pred_region
      %s13 = ssub.s32 256, 256
      %14 = vsyncadd [#allocation4], %s13
      %s16 = sshll.u32 [#allocation3], 4
      %s17 = int_to_ptr.vmem [resolvable:$true] %s16
      %19 = dma.hbm_to_vmem [thread:$0]  %s0, 256, %s17, [#allocation4]
    $region5: #{tpu_custom_call.1} parent=1 // pred_fallthru
      _
    // Predicated region
    $region6: #{tpu_custom_call.1} parent=1 // pred_check
      _
    $region7: #{tpu_custom_call.1} parent=1 // pred_check_branch
      %21 = sbr.rel (0) target = $region9
    $region8: #{tpu_custom_call.1} parent=1 // pred_region
      %s23 = ssub.s32 256, 256
      %24 = vsyncadd [#allocation7], %s23
      %s26 = sshll.u32 [#allocation6], 4
      %s27 = int_to_ptr.vmem [resolvable:$true] %s26
      %29 = dma.hbm_to_vmem [thread:$0]  %s1, 256, %s27, [#allocation7]
    $region9: #{tpu_custom_call.1} parent=1 // pred_fallthru
      _
    // Predicated region
    $region10: #{tpu_custom_call.1} parent=1 // pred_check
      _
    $region11: #{tpu_custom_call.1} parent=1 // pred_check_branch
      %31 = sbr.rel (0) target = $region13
    $region12: #{tpu_custom_call.1} parent=1 // pred_region
      %32 = dma.done [#allocation4], 256
    $region13: #{tpu_custom_call.1} parent=1 // pred_fallthru
      _
    // Predicated region
    $region14: #{tpu_custom_call.1} parent=1 // pred_check
      _
    $region15: #{tpu_custom_call.1} parent=1 // pred_check_branch
      %34 = sbr.rel (0) target = $region17
    $region16: #{tpu_custom_call.1} parent=1 // pred_region
      %35 = dma.done [#allocation7], 256
    $region17: #{tpu_custom_call.1} parent=1 // pred_fallthru
      _
    %p36 = scmp.eq.s32.totalorder 0, 0
    // Predicated region
    $region18: #{tpu_custom_call.1} parent=1 // pred_check
      %p37 = pneg %p36
    $region19: #{tpu_custom_call.1} parent=1 // pred_check_branch
      %39 = sbr.rel (%p37) target = $region21
    $region20: #{tpu_custom_call.1} parent=1 // pred_region
      %vm40 = vcmask 7168
      %41 = vst.msk [vmem:[#allocation2] sm:$0xff] %vm40, 0.0
    $region21: #{tpu_custom_call.1} parent=1 // pred_fallthru
      _
    %v42 = vld [vmem:[#allocation3] sm:$0xff]
    %v43 = vld [vmem:[#allocation3 + $0x8] sm:$0xff]
    %v44 = vld [vmem:[#allocation6] sm:$0xff]
    %v45 = vld [vmem:[#allocation6 + $0x8] sm:$0xff]
    %v46 = vsub.f32 %v42, %v44
    %v47 = vsub.f32 %v43, %v45
    %v48 = vld [vmem:[#allocation2] sm:$0xff]
    %v49 = vmul.f32 %v46, %v46
    %v50 = vmul.f32 %v47, %v47
    %v51 = vadd.f32 %v49, %v50
    %52 = vadd.xlane.f32.xlu0 %v51
    %v53 = vpop.xlane.xlu0 %52
    %v54 = vadd.f32 %v48, %v53
    %vm55 = vcmask 7168
    %56 = vst.msk [vmem:[#allocation2] sm:$0xff] %vm55, %v54
    // Predicated region
    $region22: #{tpu_custom_call.1} parent=1 // pred_check
      %p57 = pneg %p36
    $region23: #{tpu_custom_call.1} parent=1 // pred_check_branch
      %59 = sbr.rel (%p57) target = $region25
    $region24: #{tpu_custom_call.1} parent=1 // pred_region
      %v60 = vld [vmem:[#allocation2] sm:$0xff]
      %v61 = vmul.f32 %v60, 1.25
      %62 = vst.msk [vmem:[#allocation8] sm:$0xff] %vm55, %v61
    $region25: #{tpu_custom_call.1} parent=1 // pred_fallthru
      _
    // Predicated region
    $region26: #{tpu_custom_call.1} parent=1 // pred_check
      _
    $region27: #{tpu_custom_call.1} parent=1 // pred_check_branch
      %64 = sbr.rel (0) target = $region29
    $region28: #{tpu_custom_call.1} parent=1 // pred_region
      %s66 = ssub.s32 128, 128
      %67 = vsyncadd [#allocation5], %s66
      %s69 = sshll.u32 [#allocation8], 4
      %s70 = int_to_ptr.vmem [resolvable:$true] %s69
      %72 = dma.vmem_to_hbm [thread:$0]  %s70, 128, %s2, [#allocation5]
    $region29: #{tpu_custom_call.1} parent=1 // pred_fallthru
      _
    // Predicated region
    $region30: #{tpu_custom_call.1} parent=1 // pred_check
      _
    $region31: #{tpu_custom_call.1} parent=1 // pred_check_branch
      %74 = sbr.rel (0) target = $region33
    $region32: #{tpu_custom_call.1} parent=1 // pred_region
      %75 = dma.done [#allocation5], 128
    $region33: #{tpu_custom_call.1} parent=1 // pred_fallthru
      _
    %76 = vsyncpa [#allocation4], 1
    %77 = vsyncpa [#allocation7], 1
    %78 = vsyncpa [#allocation5], 1

</llo_original>
